<compile_context>
chip_gen: v5e
topology: v5e:2x2
jax: 0.10.0
libtpu: 0.0.40
codegen_flags: <defaults>
</compile_context>

<pallas_src>
import functools

import jax
import jax.numpy as jnp
from jax.experimental import pallas as pl
from jax.experimental.pallas import tpu as pltpu

IN_FEATURES = 16 * 5 * 5          # 400
H1, H2, OUT = 120, 84, 10
PAD = 128                         # lane-dense padded width for h1 / h2 / out


def _round_up(x, m):
    return ((x + m - 1) // m) * m


def mlp_head_kernel(x_ref, w1_ref, b1_ref, w2_ref, b2_ref, w3_ref, b3_ref,
                    o_ref):
    # x arrives f32 from HBM; cast to bf16 here (VPU, hidden under the DMA).
    # All matmuls are bf16 operands with f32 MXU accumulation; bias-add/ReLU
    # stay in f32 vregs (v5e VPU has no bf16 path).
    x = x_ref[...].astype(jnp.bfloat16)

    h1 = jnp.dot(x, w1_ref[...], preferred_element_type=jnp.float32)
    h1 = jnp.maximum(h1 + b1_ref[...], 0.0)

    h2 = jnp.dot(h1.astype(jnp.bfloat16), w2_ref[...],
                 preferred_element_type=jnp.float32)
    h2 = jnp.maximum(h2 + b2_ref[...], 0.0)

    out = jnp.dot(h2.astype(jnp.bfloat16), w3_ref[...],
                  preferred_element_type=jnp.float32)
    o_ref[...] = (out + b3_ref[...]).astype(o_ref.dtype)   # bf16 store


@functools.partial(jax.jit, static_argnames=("tb",))
def cifar10_cnn_head(x, params, *, tb=1024):
    """x: (B, 16, 5, 5) float32 (NCHW). Returns (B, 10) float32 logits."""
    w1, b1, w2, b2, w3, b3 = params
    B = x.shape[0]

    # Flatten exactly like torch's x.view(-1, 16*5*5).  No dtype cast and no
    # batch padding here -- both would cost an extra HBM pass over x.
    x_flat = x.reshape(B, IN_FEATURES)

    # bf16 weights, zero-padded so every hidden/output width is 128 lanes.
    # Extra rows/cols are zeros => identical math on the valid slice.
    w1p = jnp.zeros((IN_FEATURES, PAD), jnp.bfloat16).at[:, :H1].set(
        w1.astype(jnp.bfloat16))
    b1p = jnp.zeros((1, PAD), jnp.float32).at[:, :H1].set(b1)
    w2p = jnp.zeros((PAD, PAD), jnp.bfloat16).at[:H1, :H2].set(
        w2.astype(jnp.bfloat16))
    b2p = jnp.zeros((1, PAD), jnp.float32).at[:, :H2].set(b2)
    w3p = jnp.zeros((PAD, PAD), jnp.bfloat16).at[:H2, :OUT].set(
        w3.astype(jnp.bfloat16))
    b3p = jnp.zeros((1, PAD), jnp.float32).at[:, :OUT].set(b3)

    # Batch tile: multiple of 16 (bf16 sublane packing), capped at `tb`.
    # When the batch is big enough, keep at least two grid steps so both v7x
    # TensorCores get work ("parallel" batch axis).
    B16 = _round_up(B, 16)
    TB = min(tb, B16)
    if B16 >= 32:
        TB = min(TB, _round_up((B16 + 1) // 2, 16))
    TB = max(16, _round_up(TB, 16))
    grid = (pl.cdiv(B, TB),)

    rows = grid[0] * TB
    flops = 2 * rows * (IN_FEATURES * PAD + PAD * PAD + PAD * PAD)
    bytes_accessed = (
        rows * IN_FEATURES * 4                       # x read (f32)
        + rows * PAD * 2                             # padded output write (bf16)
        + (IN_FEATURES * PAD + 2 * PAD * PAD) * 2    # weights (bf16)
        + 3 * PAD * 4)                               # biases (f32)

    out = pl.pallas_call(
        mlp_head_kernel,
        out_shape=jax.ShapeDtypeStruct((B, PAD), jnp.bfloat16),
        grid_spec=pltpu.PrefetchScalarGridSpec(
            num_scalar_prefetch=0,
            grid=grid,
            in_specs=[
                pl.BlockSpec((TB, IN_FEATURES), lambda i: (i, 0)),   # x (f32)
                pl.BlockSpec((IN_FEATURES, PAD), lambda i: (0, 0)),  # w1 (pad)
                pl.BlockSpec((1, PAD),           lambda i: (0, 0)),  # b1 (pad)
                pl.BlockSpec((PAD, PAD),         lambda i: (0, 0)),  # w2 (pad)
                pl.BlockSpec((1, PAD),           lambda i: (0, 0)),  # b2 (pad)
                pl.BlockSpec((PAD, PAD),         lambda i: (0, 0)),  # w3 (pad)
                pl.BlockSpec((1, PAD),           lambda i: (0, 0)),  # b3 (pad)
            ],
            out_specs=pl.BlockSpec((TB, PAD), lambda i: (i, 0)),
        ),
        compiler_params=pltpu.CompilerParams(
            dimension_semantics=("parallel",)),
        cost_estimate=pl.CostEstimate(
            flops=flops, transcendentals=0, bytes_accessed=bytes_accessed),
    )(x_flat, w1p, b1p, w2p, b2p, w3p, b3p)

    # Slice off padded columns (and nothing in batch: out already has B rows),
    # then upcast the tiny (B, 10) logits to f32 to match the torch module.
    return out[:, :OUT].astype(jnp.float32)


def init_params(key):
    """Deterministic init mirroring nn.Linear shapes.

    torch stores W as (out, in); we store the transpose (in, out) so the
    kernel computes x @ W + b directly.  Biases kept 2D (1, out) for TPU.
    """
    dims = [(IN_FEATURES, H1), (H1, H2), (H2, OUT)]
    params = []
    for fan_in, fan_out in dims:
        kw, kb, key = jax.random.split(key, 3)
        bound = 1.0 / jnp.sqrt(fan_in)  # torch default uniform bound
        w = jax.random.uniform(kw, (fan_in, fan_out), jnp.float32,
                               minval=-bound, maxval=bound)
        b = jax.random.uniform(kb, (1, fan_out), jnp.float32,
                               minval=-bound, maxval=bound)
        params += [w, b]
    return tuple(params)


def reference_f32(x, params):
    w1, b1, w2, b2, w3, b3 = params
    h = x.reshape(x.shape[0], -1)
    h = jnp.maximum(h @ w1 + b1, 0.0)
    h = jnp.maximum(h @ w2 + b2, 0.0)
    return h @ w3 + b3


def reference_bf16(x, params):
    """Same bf16-operand / f32-accumulate math as the kernel (f32 output)."""
    w1, b1, w2, b2, w3, b3 = params
    h = x.reshape(x.shape[0], -1).astype(jnp.bfloat16)
    h = jnp.dot(h, w1.astype(jnp.bfloat16),
                preferred_element_type=jnp.float32) + b1
    h = jnp.maximum(h, 0.0)
    h = jnp.dot(h.astype(jnp.bfloat16), w2.astype(jnp.bfloat16),
                preferred_element_type=jnp.float32) + b2
    h = jnp.maximum(h, 0.0)
    return jnp.dot(h.astype(jnp.bfloat16), w3.astype(jnp.bfloat16),
                   preferred_element_type=jnp.float32) + b3


if __name__ == "__main__":
    key = jax.random.PRNGKey(0)
    kx, kx2, kx3, kp = jax.random.split(key, 4)
    params = init_params(kp)

    # Small shape implied by the module: (B, 16, 5, 5) -> view(-1, 400)
    x = jax.random.normal(kx, (2, 16, 5, 5), jnp.float32)
    out = jax.block_until_ready(cifar10_cnn_head(x, params))
    assert out.shape == (2, 10) and out.dtype == jnp.float32
    # bf16-output rounding bounds precision vs the f32-output bf16 reference.
    assert jnp.allclose(out, reference_bf16(x, params), atol=1e-2, rtol=1e-2)
    assert jnp.allclose(out, reference_f32(x, params), atol=5e-2, rtol=5e-2)

    # Multi-step grid + partial edge tile (B=40, TB=16 -> grid=(3,), last
    # block covers rows 32..47 with 40..47 out of bounds).
    x2 = jax.random.normal(kx2, (40, 16, 5, 5), jnp.float32)
    out2 = jax.block_until_ready(cifar10_cnn_head(x2, params, tb=16))
    assert out2.shape == (40, 10)
    assert jnp.allclose(out2, reference_bf16(x2, params), atol=1e-2, rtol=1e-2)

    # Default tile with B >= 32: grid gets split into 2 "parallel" steps
    # (exercises the v7x two-TensorCore path; harmless on v5e/v6e).
    x3 = jax.random.normal(kx3, (64, 16, 5, 5), jnp.float32)
    out3 = jax.block_until_ready(cifar10_cnn_head(x3, params))
    assert out3.shape == (64, 10)
    assert jnp.allclose(out3, reference_bf16(x3, params), atol=1e-2, rtol=1e-2)

    print("KERNEL_OK")
</pallas_src>

<mosaic_0001>
module attributes {stable_mosaic.version = 11 : i64} {
  func.func @mlp_head_kernel(%arg0: i32, %arg1: memref<16x400xf32, #tpu.memory_space<vmem>>, %arg2: memref<400x128xbf16, #tpu.memory_space<vmem>>, %arg3: memref<1x128xf32, #tpu.memory_space<vmem>>, %arg4: memref<128x128xbf16, #tpu.memory_space<vmem>>, %arg5: memref<1x128xf32, #tpu.memory_space<vmem>>, %arg6: memref<128x128xbf16, #tpu.memory_space<vmem>>, %arg7: memref<1x128xf32, #tpu.memory_space<vmem>>, %arg8: memref<16x128xbf16, #tpu.memory_space<vmem>>) attributes {dimension_semantics = [#tpu.dimension_semantics<parallel>], iteration_bounds = array<i64: 1>, scalar_prefetch = 0 : i64, scratch_operands = 0 : i64, tpu.core_type = #tpu.core_type<tc>, window_params = [{transform_indices = @transform_0, window_bounds = array<i64: 16, 400>}, {pipeline_mode = #tpu.pipeline_mode<synchronous>, transform_indices = @transform_1, window_bounds = array<i64: 400, 128>}, {pipeline_mode = #tpu.pipeline_mode<synchronous>, transform_indices = @transform_2, window_bounds = array<i64: 1, 128>}, {pipeline_mode = #tpu.pipeline_mode<synchronous>, transform_indices = @transform_3, window_bounds = array<i64: 128, 128>}, {pipeline_mode = #tpu.pipeline_mode<synchronous>, transform_indices = @transform_4, window_bounds = array<i64: 1, 128>}, {pipeline_mode = #tpu.pipeline_mode<synchronous>, transform_indices = @transform_5, window_bounds = array<i64: 128, 128>}, {pipeline_mode = #tpu.pipeline_mode<synchronous>, transform_indices = @transform_6, window_bounds = array<i64: 1, 128>}, {transform_indices = @transform_7, window_bounds = array<i64: 16, 128>}]} {
    %c0 = arith.constant 0 : index
    %c0_0 = arith.constant 0 : index
    %0 = vector.load %arg1[%c0, %c0_0] : memref<16x400xf32, #tpu.memory_space<vmem>>, vector<16x400xf32>
    %1 = arith.truncf %0 : vector<16x400xf32> to vector<16x400xbf16>
    %c0_1 = arith.constant 0 : index
    %c0_2 = arith.constant 0 : index
    %2 = vector.load %arg2[%c0_1, %c0_2] : memref<400x128xbf16, #tpu.memory_space<vmem>>, vector<400x128xbf16>
    %cst = arith.constant dense<0.000000e+00> : vector<16x128xf32>
    %3 = tpu.matmul %1, %2, %cst {dimension_numbers = #tpu.dot_dimension_numbers<[1], [0], [0], [1], [0, 0, 1, 1], [], []>} : vector<16x400xbf16>, vector<400x128xbf16>, vector<16x128xf32> -> vector<16x128xf32>
    %c0_3 = arith.constant 0 : index
    %c0_4 = arith.constant 0 : index
    %4 = vector.load %arg3[%c0_3, %c0_4] : memref<1x128xf32, #tpu.memory_space<vmem>>, vector<1x128xf32>
    %5 = vector.broadcast %4 : vector<1x128xf32> to vector<16x128xf32>
    %6 = arith.addf %3, %5 : vector<16x128xf32>
    %cst_5 = arith.constant 0.000000e+00 : f32
    %7 = vector.broadcast %cst_5 : f32 to vector<16x128xf32>
    %8 = arith.maximumf %6, %7 : vector<16x128xf32>
    %9 = arith.truncf %8 : vector<16x128xf32> to vector<16x128xbf16>
    %c0_6 = arith.constant 0 : index
    %c0_7 = arith.constant 0 : index
    %10 = vector.load %arg4[%c0_6, %c0_7] : memref<128x128xbf16, #tpu.memory_space<vmem>>, vector<128x128xbf16>
    %cst_8 = arith.constant dense<0.000000e+00> : vector<16x128xf32>
    %11 = tpu.matmul %9, %10, %cst_8 {dimension_numbers = #tpu.dot_dimension_numbers<[1], [0], [0], [1], [0, 0, 1, 1], [], []>} : vector<16x128xbf16>, vector<128x128xbf16>, vector<16x128xf32> -> vector<16x128xf32>
    %c0_9 = arith.constant 0 : index
    %c0_10 = arith.constant 0 : index
    %12 = vector.load %arg5[%c0_9, %c0_10] : memref<1x128xf32, #tpu.memory_space<vmem>>, vector<1x128xf32>
    %13 = vector.broadcast %12 : vector<1x128xf32> to vector<16x128xf32>
    %14 = arith.addf %11, %13 : vector<16x128xf32>
    %cst_11 = arith.constant 0.000000e+00 : f32
    %15 = vector.broadcast %cst_11 : f32 to vector<16x128xf32>
    %16 = arith.maximumf %14, %15 : vector<16x128xf32>
    %17 = arith.truncf %16 : vector<16x128xf32> to vector<16x128xbf16>
    %c0_12 = arith.constant 0 : index
    %c0_13 = arith.constant 0 : index
    %18 = vector.load %arg6[%c0_12, %c0_13] : memref<128x128xbf16, #tpu.memory_space<vmem>>, vector<128x128xbf16>
    %cst_14 = arith.constant dense<0.000000e+00> : vector<16x128xf32>
    %19 = tpu.matmul %17, %18, %cst_14 {dimension_numbers = #tpu.dot_dimension_numbers<[1], [0], [0], [1], [0, 0, 1, 1], [], []>} : vector<16x128xbf16>, vector<128x128xbf16>, vector<16x128xf32> -> vector<16x128xf32>
    %c0_15 = arith.constant 0 : index
    %c0_16 = arith.constant 0 : index
    %20 = vector.load %arg7[%c0_15, %c0_16] : memref<1x128xf32, #tpu.memory_space<vmem>>, vector<1x128xf32>
    %21 = vector.broadcast %20 : vector<1x128xf32> to vector<16x128xf32>
    %22 = arith.addf %19, %21 : vector<16x128xf32>
    %23 = arith.truncf %22 : vector<16x128xf32> to vector<16x128xbf16>
    %c0_17 = arith.constant 0 : index
    %c0_18 = arith.constant 0 : index
    %24 = vector.load %arg8[%c0_17, %c0_18] : memref<16x128xbf16, #tpu.memory_space<vmem>>, vector<16x128xbf16>
    tpu.vector_store %arg8[%c0_17, %c0_18], %23 {strides = array<i32>} : memref<16x128xbf16, #tpu.memory_space<vmem>>, vector<16x128xbf16>,
    return
  }
  func.func @transform_0(%arg0: i32) -> (i32, i32) {
    %c0_i32 = arith.constant 0 : i32
    %c0_i32_0 = arith.constant 0 : i32
    return %arg0, %c0_i32 : i32, i32
  }
  func.func @transform_1(%arg0: i32) -> (i32, i32) {
    %c0_i32 = arith.constant 0 : i32
    %c0_i32_0 = arith.constant 0 : i32
    %c0_i32_1 = arith.constant 0 : i32
    return %c0_i32, %c0_i32_0 : i32, i32
  }
  func.func @transform_2(%arg0: i32) -> (i32, i32) {
    %c0_i32 = arith.constant 0 : i32
    %c0_i32_0 = arith.constant 0 : i32
    %c0_i32_1 = arith.constant 0 : i32
    return %c0_i32, %c0_i32_0 : i32, i32
  }
  func.func @transform_3(%arg0: i32) -> (i32, i32) {
    %c0_i32 = arith.constant 0 : i32
    %c0_i32_0 = arith.constant 0 : i32
    %c0_i32_1 = arith.constant 0 : i32
    return %c0_i32, %c0_i32_0 : i32, i32
  }
  func.func @transform_4(%arg0: i32) -> (i32, i32) {
    %c0_i32 = arith.constant 0 : i32
    %c0_i32_0 = arith.constant 0 : i32
    %c0_i32_1 = arith.constant 0 : i32
    return %c0_i32, %c0_i32_0 : i32, i32
  }
  func.func @transform_5(%arg0: i32) -> (i32, i32) {
    %c0_i32 = arith.constant 0 : i32
    %c0_i32_0 = arith.constant 0 : i32
    %c0_i32_1 = arith.constant 0 : i32
    return %c0_i32, %c0_i32_0 : i32, i32
  }
  func.func @transform_6(%arg0: i32) -> (i32, i32) {
    %c0_i32 = arith.constant 0 : i32
    %c0_i32_0 = arith.constant 0 : i32
    %c0_i32_1 = arith.constant 0 : i32
    return %c0_i32, %c0_i32_0 : i32, i32
  }
  func.func @transform_7(%arg0: i32) -> (i32, i32) {
    %c0_i32 = arith.constant 0 : i32
    %c0_i32_0 = arith.constant 0 : i32
    return %arg0, %c0_i32 : i32, i32
  }
}

</mosaic_0001>

<llo_original>
// kernel: cifar10_cnn_head.1
$region0: #{cifar10_cnn_head.1}
  #allocation0 [shape = 'u32[]', space=smem, size = 0x4, offset = 0x4, fixed_abs, tag = 'smem constant byte address 0x4 - core index']
  #allocation1 [shape = 'u32[72,128]{1,0:T(1,128)}', space=vmem, size = 0x9000, scoped, tag = 'internal scratch']
  %s0 = inlined_call_operand.vmem [shape: f32[2,400], index: 0, kind: input, shape index: {}]
  %s1 = inlined_call_operand.vmem [shape: bf16[400,128], index: 1, kind: input, shape index: {}]
  %s2 = inlined_call_operand.vmem [shape: f32[1,128], index: 2, kind: input, shape index: {}]
  %s3 = inlined_call_operand.vmem [shape: bf16[128,128], index: 3, kind: input, shape index: {}]
  %s4 = inlined_call_operand.vmem [shape: f32[1,128], index: 4, kind: input, shape index: {}]
  %s5 = inlined_call_operand.vmem [shape: bf16[128,128], index: 5, kind: input, shape index: {}]
  %s6 = inlined_call_operand.vmem [shape: f32[1,128], index: 6, kind: input, shape index: {}]
  %s7 = inlined_call_operand.vmem [shape: bf16[2,128], index: 7, kind: output, shape index: {}]
  %s8 = sld [smem:[#allocation0]]
  $region68: #{cifar10_cnn_head.1} parent=0
    _
  %s10 = ssub.s32 1, %s8
  %s11 = scalar_select 0, %s10, %s8
  $region1: #{cifar10_cnn_head.1} parent=0
    #allocation2 [shape = 'u8[4096]{0}', space=vmem, size = 0x1000, scoped, tag = 'output window, operand 0, single buffered']
    // Predicated region
    $region2: #{cifar10_cnn_head.1} parent=1 // pred_check
      _
    $region3: #{cifar10_cnn_head.1} parent=1 // pred_check_branch
      %13 = sbr.rel (0) target = $region5
    $region4: #{cifar10_cnn_head.1} parent=1 // pred_region
      _
    $region5: #{cifar10_cnn_head.1} parent=1 // pred_fallthru
      _
    // Predicated region
    $region6: #{cifar10_cnn_head.1} parent=1 // pred_check
      _
    $region7: #{cifar10_cnn_head.1} parent=1 // pred_check_branch
      %15 = sbr.rel (0) target = $region9
    $region8: #{cifar10_cnn_head.1} parent=1 // pred_region
      _
    $region9: #{cifar10_cnn_head.1} parent=1 // pred_fallthru
      _
    // Predicated region
    $region10: #{cifar10_cnn_head.1} parent=1 // pred_check
      _
    $region11: #{cifar10_cnn_head.1} parent=1 // pred_check_branch
      %17 = sbr.rel (0) target = $region13
    $region12: #{cifar10_cnn_head.1} parent=1 // pred_region
      _
    $region13: #{cifar10_cnn_head.1} parent=1 // pred_fallthru
      _
    // Predicated region
    $region14: #{cifar10_cnn_head.1} parent=1 // pred_check
      _
    $region15: #{cifar10_cnn_head.1} parent=1 // pred_check_branch
      %19 = sbr.rel (0) target = $region17
    $region16: #{cifar10_cnn_head.1} parent=1 // pred_region
      _
    $region17: #{cifar10_cnn_head.1} parent=1 // pred_fallthru
      _
    // Predicated region
    $region18: #{cifar10_cnn_head.1} parent=1 // pred_check
      _
    $region19: #{cifar10_cnn_head.1} parent=1 // pred_check_branch
      %21 = sbr.rel (0) target = $region21
    $region20: #{cifar10_cnn_head.1} parent=1 // pred_region
      _
    $region21: #{cifar10_cnn_head.1} parent=1 // pred_fallthru
      _
    // Predicated region
    $region22: #{cifar10_cnn_head.1} parent=1 // pred_check
      _
    $region23: #{cifar10_cnn_head.1} parent=1 // pred_check_branch
      %23 = sbr.rel (0) target = $region25
    $region24: #{cifar10_cnn_head.1} parent=1 // pred_region
      _
    $region25: #{cifar10_cnn_head.1} parent=1 // pred_fallthru
      _
    // Predicated region
    $region26: #{cifar10_cnn_head.1} parent=1 // pred_check
      _
    $region27: #{cifar10_cnn_head.1} parent=1 // pred_check_branch
      %25 = sbr.rel (0) target = $region29
    $region28: #{cifar10_cnn_head.1} parent=1 // pred_region
      _
    $region29: #{cifar10_cnn_head.1} parent=1 // pred_fallthru
      _
    %v27 = vld [vmem:[%s0] sm:$0xff]
    %v28 = vld [vmem:[%s0 + $0x8] sm:$0xff]
    %v29 = vld [vmem:[%s0 + $0x10] sm:$0xff]
    %v30 = vld [vmem:[%s0 + $0x18] sm:$0xff]
    %v31 = vld [vmem:[%s0 + $0x20] sm:$0xff]
    %v32 = vld [vmem:[%s0 + $0x28] sm:$0xff]
    %v33 = vld [vmem:[%s0 + $0x30] sm:$0xff]
    %v34 = vld [vmem:[%s0 + $0x38] sm:$0xff]
    %43 = vst [vmem:[#allocation1] ss:$4 sm:$0xff] %v27
    %s44 = scalar_lea.vmem [#allocation1], 1
    %45 = vst [vmem:[%s44] ss:$4 sm:$0xff] %v28
    %s46 = scalar_lea.vmem [#allocation1], 2
    %47 = vst [vmem:[%s46] ss:$4 sm:$0xff] %v29
    %s48 = scalar_lea.vmem [#allocation1], 3
    %49 = vst [vmem:[%s48] ss:$4 sm:$0xff] %v30
    %s50 = scalar_lea.vmem [#allocation1], 32
    %51 = vst [vmem:[%s50] ss:$4 sm:$0xff] %v31
    %s52 = scalar_lea.vmem [#allocation1], 33
    %53 = vst [vmem:[%s52] ss:$4 sm:$0xff] %v32
    %s54 = scalar_lea.vmem [#allocation1], 34
    %55 = vst [vmem:[%s54] ss:$4 sm:$0xff] %v33
    %s56 = scalar_lea.vmem [#allocation1], 35
    %57 = vst [vmem:[%s56] ss:$4 sm:$0xff] %v34
    %v58 = vld.sshfl [vmem:[#allocation1] sm:$0xff pattern:$0x73625140]
    %v59 = vld.sshfl [vmem:[#allocation1 + $0x8] sm:$0xff pattern:$0x73625140]
    %v60 = vld.sshfl [vmem:[#allocation1 + $0x10] sm:$0xff pattern:$0x73625140]
    %v61 = vld.sshfl [vmem:[#allocation1 + $0x18] sm:$0xff pattern:$0x73625140]
    %v62 = vld.sshfl [vmem:[#allocation1 + $0x20] sm:$0xff pattern:$0x73625140]
    %v63 = vld.sshfl [vmem:[#allocation1 + $0x28] sm:$0xff pattern:$0x73625140]
    %v64 = vld.sshfl [vmem:[#allocation1 + $0x30] sm:$0xff pattern:$0x73625140]
    %v65 = vld.sshfl [vmem:[#allocation1 + $0x38] sm:$0xff pattern:$0x73625140]
    %v74 = vpack.c.bf16 %v62, %v58
    %v75 = vpack.c.bf16 %v63, %v59
    %v76 = vpack.c.bf16 %v64, %v60
    %v77 = vpack.c.bf16 %v65, %v61
    %v78 = vld [vmem:[%s1] sm:$0xf]
    %v79 = vld [vmem:[%s1 + $0x4] sm:$0xf]
    %v80 = vld [vmem:[%s1 + $0x8] sm:$0xf]
    %v81 = vld [vmem:[%s1 + $0xc] sm:$0xf]
    %v82 = vld [vmem:[%s1 + $0x10] sm:$0xf]
    %v83 = vld [vmem:[%s1 + $0x14] sm:$0xf]
    %v84 = vld [vmem:[%s1 + $0x18] sm:$0xf]
    %v85 = vld [vmem:[%s1 + $0x1c] sm:$0xf]
    %v86 = vld [vmem:[%s1 + $0x20] sm:$0xf]
    %v87 = vld [vmem:[%s1 + $0x24] sm:$0xf]
    %v88 = vld [vmem:[%s1 + $0x28] sm:$0xf]
    %v89 = vld [vmem:[%s1 + $0x2c] sm:$0xf]
    %v90 = vld [vmem:[%s1 + $0x30] sm:$0xf]
    %v91 = vld [vmem:[%s1 + $0x34] sm:$0xf]
    %v92 = vld [vmem:[%s1 + $0x38] sm:$0xf]
    %v93 = vld [vmem:[%s1 + $0x3c] sm:$0xf]
    %v94 = vld [vmem:[%s1 + $0x40] sm:$0xf]
    %v95 = vld [vmem:[%s1 + $0x44] sm:$0xf]
    %v96 = vld [vmem:[%s1 + $0x48] sm:$0xf]
    %v97 = vld [vmem:[%s1 + $0x4c] sm:$0xf]
    %v98 = vld [vmem:[%s1 + $0x50] sm:$0xf]
    %v99 = vld [vmem:[%s1 + $0x54] sm:$0xf]
    %v100 = vld [vmem:[%s1 + $0x58] sm:$0xf]
    %v101 = vld [vmem:[%s1 + $0x5c] sm:$0xf]
    %v102 = vld [vmem:[%s1 + $0x60] sm:$0xf]
    %v103 = vld [vmem:[%s1 + $0x64] sm:$0xf]
    %v104 = vld [vmem:[%s1 + $0x68] sm:$0xf]
    %v105 = vld [vmem:[%s1 + $0x6c] sm:$0xf]
    %v106 = vld [vmem:[%s1 + $0x70] sm:$0xf]
    %v107 = vld [vmem:[%s1 + $0x74] sm:$0xf]
    %v108 = vld [vmem:[%s1 + $0x78] sm:$0xf]
    %v109 = vld [vmem:[%s1 + $0x7c] sm:$0xf]
    %v110 = vld [vmem:[%s1 + $0x80] sm:$0xf]
    %v111 = vld [vmem:[%s1 + $0x84] sm:$0xf]
    %v112 = vld [vmem:[%s1 + $0x88] sm:$0xf]
    %v113 = vld [vmem:[%s1 + $0x8c] sm:$0xf]
    %v114 = vld [vmem:[%s1 + $0x90] sm:$0xf]
    %v115 = vld [vmem:[%s1 + $0x94] sm:$0xf]
    %v116 = vld [vmem:[%s1 + $0x98] sm:$0xf]
    %v117 = vld [vmem:[%s1 + $0x9c] sm:$0xf]
    %v118 = vld [vmem:[%s1 + $0xa0] sm:$0xf]
    %v119 = vld [vmem:[%s1 + $0xa4] sm:$0xf]
    %v120 = vld [vmem:[%s1 + $0xa8] sm:$0xf]
    %v121 = vld [vmem:[%s1 + $0xac] sm:$0xf]
    %v122 = vld [vmem:[%s1 + $0xb0] sm:$0xf]
    %v123 = vld [vmem:[%s1 + $0xb4] sm:$0xf]
    %v124 = vld [vmem:[%s1 + $0xb8] sm:$0xf]
    %v125 = vld [vmem:[%s1 + $0xbc] sm:$0xf]
    %v126 = vld [vmem:[%s1 + $0xc0] sm:$0xf]
    %v127 = vld [vmem:[%s1 + $0xc4] sm:$0xf]
    %v128 = vld [vmem:[%s2] sm:$0x1]
    %v130 = vperm.slane %v128, 0
    %v182 = vunpack.c.l.b16 %v78
    %v183 = vunpack.c.l.b16 %v79
    %v184 = vunpack.c.l.b16 %v80
    %v185 = vunpack.c.l.b16 %v81
    %v186 = vunpack.c.l.b16 %v82
    %v187 = vunpack.c.l.b16 %v83
    %v188 = vunpack.c.l.b16 %v84
    %v189 = vunpack.c.l.b16 %v85
    %v190 = vunpack.c.l.b16 %v86
    %v191 = vunpack.c.l.b16 %v87
    %v192 = vunpack.c.l.b16 %v88
    %v193 = vunpack.c.l.b16 %v89
    %v194 = vunpack.c.l.b16 %v90
    %v195 = vunpack.c.l.b16 %v91
    %v196 = vunpack.c.l.b16 %v92
    %v197 = vunpack.c.l.b16 %v93
    %v198 = vunpack.c.l.b16 %v94
    %v199 = vunpack.c.l.b16 %v95
    %v200 = vunpack.c.l.b16 %v96
    %v201 = vunpack.c.l.b16 %v97
    %v202 = vunpack.c.l.b16 %v98
    %v203 = vunpack.c.l.b16 %v99
    %v204 = vunpack.c.l.b16 %v100
    %v205 = vunpack.c.l.b16 %v101
    %v206 = vunpack.c.l.b16 %v102
    %v207 = vunpack.c.l.b16 %v103
    %v208 = vunpack.c.l.b16 %v104
    %v209 = vunpack.c.l.b16 %v105
    %v210 = vunpack.c.l.b16 %v106
    %v211 = vunpack.c.l.b16 %v107
    %v212 = vunpack.c.l.b16 %v108
    %v213 = vunpack.c.l.b16 %v109
    %v214 = vunpack.c.l.b16 %v110
    %v215 = vunpack.c.l.b16 %v111
    %v216 = vunpack.c.l.b16 %v112
    %v217 = vunpack.c.l.b16 %v113
    %v218 = vunpack.c.l.b16 %v114
    %v219 = vunpack.c.l.b16 %v115
    %v220 = vunpack.c.l.b16 %v116
    %v221 = vunpack.c.l.b16 %v117
    %v222 = vunpack.c.l.b16 %v118
    %v223 = vunpack.c.l.b16 %v119
    %v224 = vunpack.c.l.b16 %v120
    %v225 = vunpack.c.l.b16 %v121
    %v226 = vunpack.c.l.b16 %v122
    %v227 = vunpack.c.l.b16 %v123
    %v228 = vunpack.c.l.b16 %v124
    %v229 = vunpack.c.l.b16 %v125
    %v230 = vunpack.c.l.b16 %v126
    %v231 = vunpack.c.l.b16 %v127
    %v232 = vpack.c.b16 %v183, %v182
    %v233 = vpack.c.b16 %v185, %v184
    %v234 = vpack.c.b16 %v187, %v186
    %v235 = vpack.c.b16 %v189, %v188
    %v236 = vpack.c.b16 %v191, %v190
    %v237 = vpack.c.b16 %v193, %v192
    %v238 = vpack.c.b16 %v195, %v194
    %v239 = vpack.c.b16 %v197, %v196
    %v240 = vpack.c.b16 %v199, %v198
    %v241 = vpack.c.b16 %v201, %v200
    %v242 = vpack.c.b16 %v203, %v202
    %v243 = vpack.c.b16 %v205, %v204
    %v244 = vpack.c.b16 %v207, %v206
    %v245 = vpack.c.b16 %v209, %v208
    %v246 = vpack.c.b16 %v211, %v210
    %v247 = vpack.c.b16 %v213, %v212
    %v248 = vpack.c.b16 %v215, %v214
    %v249 = vpack.c.b16 %v217, %v216
    %v250 = vpack.c.b16 %v219, %v218
    %v251 = vpack.c.b16 %v221, %v220
    %v252 = vpack.c.b16 %v223, %v222
    %v253 = vpack.c.b16 %v225, %v224
    %v254 = vpack.c.b16 %v227, %v226
    %v255 = vpack.c.b16 %v229, %v228
    %v256 = vpack.c.b16 %v231, %v230
    %vm282 = vcmask 130048
    %v284 = vsel %vm282, %v77, 0
    %286 = vmatpush.bf16.msra.mxu0 %v239
    %287 = vmatpush.bf16.msra.mxu0 %v238
    %288 = vmatpush.bf16.msra.mxu0 %v237
    %289 = vmatpush.bf16.msra.mxu0 %v236
    %290 = vmatpush.bf16.msra.mxu0 %v235
    %291 = vmatpush.bf16.msra.mxu0 %v234
    %292 = vmatpush.bf16.msra.mxu0 %v233
    %293 = vmatpush.bf16.msra.mxu0 %v232
    %294 = vmatmul.bf16.gmra.mxu0 %v74
    %v295 = vpop.f32.mrf.mxu0
    %v296 = vadd.f32 %v130, %v295
    %v297 = vpop.f32.mrf.mxu0
    %v298 = vadd.f32 %v130, %v297
    %299 = vdwg.mxu0
    %300 = vmatpush.bf16.msra.mxu0 %v247
    %301 = vmatpush.bf16.msra.mxu0 %v246
    %302 = vmatpush.bf16.msra.mxu0 %v245
    %303 = vmatpush.bf16.msra.mxu0 %v244
    %304 = vmatpush.bf16.msra.mxu0 %v243
    %305 = vmatpush.bf16.msra.mxu0 %v242
    %306 = vmatpush.bf16.msra.mxu0 %v241
    %307 = vmatpush.bf16.msra.mxu0 %v240
    %308 = vmatmul.bf16.gmra.mxu0 %v75
    %v309 = vpop.f32.mrf.mxu0
    %v310 = vadd.f32 %v296, %v309
    %v311 = vpop.f32.mrf.mxu0
    %v312 = vadd.f32 %v298, %v311
    %313 = vdwg.mxu0
    %314 = vmatpush.bf16.msra.mxu0 %v255
    %315 = vmatpush.bf16.msra.mxu0 %v254
    %316 = vmatpush.bf16.msra.mxu0 %v253
    %317 = vmatpush.bf16.msra.mxu0 %v252
    %318 = vmatpush.bf16.msra.mxu0 %v251
    %319 = vmatpush.bf16.msra.mxu0 %v250
    %320 = vmatpush.bf16.msra.mxu0 %v249
    %321 = vmatpush.bf16.msra.mxu0 %v248
    %322 = vmatmul.bf16.gmra.mxu0 %v76
    %v323 = vpop.f32.mrf.mxu0
    %v324 = vadd.f32 %v310, %v323
    %v325 = vpop.f32.mrf.mxu0
    %v326 = vadd.f32 %v312, %v325
    %327 = vdwg.mxu0
    %328 = vmatpush.bf16.msra.mxu0 0
    %329 = vmatpush.bf16.msra.mxu0 0
    %330 = vmatpush.bf16.msra.mxu0 0
    %331 = vmatpush.bf16.msra.mxu0 0
    %332 = vmatpush.bf16.msra.mxu0 0
    %333 = vmatpush.bf16.msra.mxu0 0
    %334 = vmatpush.bf16.msra.mxu0 0
    %335 = vmatpush.bf16.msra.mxu0 %v256
    %336 = vmatmul.bf16.gmra.mxu0 %v284
    %v337 = vpop.f32.mrf.mxu0
    %v338 = vadd.f32 %v324, %v337
    %v339 = vpop.f32.mrf.mxu0
    %v340 = vadd.f32 %v326, %v339
    %341 = vdwg.mxu0
    %v342 = vmax.f32 %v338, 0.0
    %v343 = vmax.f32 %v340, 0.0
    %v344 = vpack.c.bf16 %v343, %v342
    %v345 = vld [vmem:[%s3] sm:$0xf]
    %v346 = vld [vmem:[%s3 + $0x4] sm:$0xf]
    %v347 = vld [vmem:[%s3 + $0x8] sm:$0xf]
    %v348 = vld [vmem:[%s3 + $0xc] sm:$0xf]
    %v349 = vld [vmem:[%s3 + $0x10] sm:$0xf]
    %v350 = vld [vmem:[%s3 + $0x14] sm:$0xf]
    %v351 = vld [vmem:[%s3 + $0x18] sm:$0xf]
    %v352 = vld [vmem:[%s3 + $0x1c] sm:$0xf]
    %v353 = vld [vmem:[%s3 + $0x20] sm:$0xf]
    %v354 = vld [vmem:[%s3 + $0x24] sm:$0xf]
    %v355 = vld [vmem:[%s3 + $0x28] sm:$0xf]
    %v356 = vld [vmem:[%s3 + $0x2c] sm:$0xf]
    %v357 = vld [vmem:[%s3 + $0x30] sm:$0xf]
    %v358 = vld [vmem:[%s3 + $0x34] sm:$0xf]
    %v359 = vld [vmem:[%s3 + $0x38] sm:$0xf]
    %v360 = vld [vmem:[%s3 + $0x3c] sm:$0xf]
    %v361 = vld [vmem:[%s4] sm:$0x1]
    %v363 = vperm.slane %v361, 0
    %v381 = vunpack.c.l.b16 %v345
    %v382 = vunpack.c.l.b16 %v346
    %v383 = vunpack.c.l.b16 %v347
    %v384 = vunpack.c.l.b16 %v348
    %v385 = vunpack.c.l.b16 %v349
    %v386 = vunpack.c.l.b16 %v350
    %v387 = vunpack.c.l.b16 %v351
    %v388 = vunpack.c.l.b16 %v352
    %v389 = vunpack.c.l.b16 %v353
    %v390 = vunpack.c.l.b16 %v354
    %v391 = vunpack.c.l.b16 %v355
    %v392 = vunpack.c.l.b16 %v356
    %v393 = vunpack.c.l.b16 %v357
    %v394 = vunpack.c.l.b16 %v358
    %v395 = vunpack.c.l.b16 %v359
    %v396 = vunpack.c.l.b16 %v360
    %v397 = vpack.c.b16 %v382, %v381
    %v398 = vpack.c.b16 %v384, %v383
    %v399 = vpack.c.b16 %v386, %v385
    %v400 = vpack.c.b16 %v388, %v387
    %v401 = vpack.c.b16 %v390, %v389
    %v402 = vpack.c.b16 %v392, %v391
    %v403 = vpack.c.b16 %v394, %v393
    %v404 = vpack.c.b16 %v396, %v395
    %413 = vmatpush.bf16.msra.mxu0 %v404
    %414 = vmatpush.bf16.msra.mxu0 %v403
    %415 = vmatpush.bf16.msra.mxu0 %v402
    %416 = vmatpush.bf16.msra.mxu0 %v401
    %417 = vmatpush.bf16.msra.mxu0 %v400
    %418 = vmatpush.bf16.msra.mxu0 %v399
    %419 = vmatpush.bf16.msra.mxu0 %v398
    %420 = vmatpush.bf16.msra.mxu0 %v397
    %421 = vmatmul.bf16.gmra.mxu0 %v344
    %v422 = vpop.f32.mrf.mxu0
    %v423 = vadd.f32 %v363, %v422
    %v424 = vpop.f32.mrf.mxu0
    %v425 = vadd.f32 %v363, %v424
    %426 = vdwg.mxu0
    %v427 = vmax.f32 %v423, 0.0
    %v428 = vmax.f32 %v425, 0.0
    %v429 = vpack.c.bf16 %v428, %v427
    %v430 = vld [vmem:[%s5] sm:$0xf]
    %v431 = vld [vmem:[%s5 + $0x4] sm:$0xf]
    %v432 = vld [vmem:[%s5 + $0x8] sm:$0xf]
    %v433 = vld [vmem:[%s5 + $0xc] sm:$0xf]
    %v434 = vld [vmem:[%s5 + $0x10] sm:$0xf]
    %v435 = vld [vmem:[%s5 + $0x14] sm:$0xf]
    %v436 = vld [vmem:[%s5 + $0x18] sm:$0xf]
    %v437 = vld [vmem:[%s5 + $0x1c] sm:$0xf]
    %v438 = vld [vmem:[%s5 + $0x20] sm:$0xf]
    %v439 = vld [vmem:[%s5 + $0x24] sm:$0xf]
    %v440 = vld [vmem:[%s5 + $0x28] sm:$0xf]
    %v441 = vld [vmem:[%s5 + $0x2c] sm:$0xf]
    %v442 = vld [vmem:[%s5 + $0x30] sm:$0xf]
    %v443 = vld [vmem:[%s5 + $0x34] sm:$0xf]
    %v444 = vld [vmem:[%s5 + $0x38] sm:$0xf]
    %v445 = vld [vmem:[%s5 + $0x3c] sm:$0xf]
    %v446 = vld [vmem:[%s6] sm:$0x1]
    %v448 = vperm.slane %v446, 0
    %v466 = vunpack.c.l.b16 %v430
    %v467 = vunpack.c.l.b16 %v431
    %v468 = vunpack.c.l.b16 %v432
    %v469 = vunpack.c.l.b16 %v433
    %v470 = vunpack.c.l.b16 %v434
    %v471 = vunpack.c.l.b16 %v435
    %v472 = vunpack.c.l.b16 %v436
    %v473 = vunpack.c.l.b16 %v437
    %v474 = vunpack.c.l.b16 %v438
    %v475 = vunpack.c.l.b16 %v439
    %v476 = vunpack.c.l.b16 %v440
    %v477 = vunpack.c.l.b16 %v441
    %v478 = vunpack.c.l.b16 %v442
    %v479 = vunpack.c.l.b16 %v443
    %v480 = vunpack.c.l.b16 %v444
    %v481 = vunpack.c.l.b16 %v445
    %v482 = vpack.c.b16 %v467, %v466
    %v483 = vpack.c.b16 %v469, %v468
    %v484 = vpack.c.b16 %v471, %v470
    %v485 = vpack.c.b16 %v473, %v472
    %v486 = vpack.c.b16 %v475, %v474
    %v487 = vpack.c.b16 %v477, %v476
    %v488 = vpack.c.b16 %v479, %v478
    %v489 = vpack.c.b16 %v481, %v480
    %498 = vmatpush.bf16.msra.mxu0 %v489
    %499 = vmatpush.bf16.msra.mxu0 %v488
    %500 = vmatpush.bf16.msra.mxu0 %v487
    %501 = vmatpush.bf16.msra.mxu0 %v486
    %502 = vmatpush.bf16.msra.mxu0 %v485
    %503 = vmatpush.bf16.msra.mxu0 %v484
    %504 = vmatpush.bf16.msra.mxu0 %v483
    %505 = vmatpush.bf16.msra.mxu0 %v482
    %506 = vmatmul.bf16.gmra.mxu0 %v429
    %v507 = vpop.f32.mrf.mxu0
    %v508 = vadd.f32 %v448, %v507
    %v509 = vpop.f32.mrf.mxu0
    %v510 = vadd.f32 %v448, %v509
    %511 = vdwg.mxu0
    %v512 = vpack.c.bf16 %v508, %v508
    %v513 = vpack.c.bf16 %v510, %v510
    %v516 = vrot.slane %v512, 3
    %v517 = vrot.slane %v513, 3
    %vm518 = vcmask 1040384
    %v521 = vsel %vm518, %v512, %v516
    %vm522 = vcmask 1041409
    %v523 = vsel %vm522, %v512, %v516
    %v525 = vrot.slane %v523, 1
    %vm526 = vcmask 1042434
    %v527 = vsel %vm526, %v512, %v516
    %v529 = vrot.slane %v527, 2
    %vm530 = vcmask 1043459
    %v531 = vsel %vm530, %v512, %v516
    %v533 = vrot.slane %v531, 3
    %v536 = vsel %vm518, %v513, %v517
    %v537 = vsel %vm522, %v513, %v517
    %v539 = vrot.slane %v537, 1
    %v540 = vsel %vm526, %v513, %v517
    %v542 = vrot.slane %v540, 2
    %v543 = vsel %vm530, %v513, %v517
    %v545 = vrot.slane %v543, 3
    %554 = vst [vmem:[#allocation2] sm:$0x1] %v521
    %555 = vst [vmem:[#allocation2 + $0x1] sm:$0x1] %v525
    %556 = vst [vmem:[#allocation2 + $0x2] sm:$0x1] %v529
    %557 = vst [vmem:[#allocation2 + $0x3] sm:$0x1] %v533
    %558 = vst [vmem:[#allocation2 + $0x4] sm:$0x1] %v536
    %559 = vst [vmem:[#allocation2 + $0x5] sm:$0x1] %v539
    %560 = vst [vmem:[#allocation2 + $0x6] sm:$0x1] %v542
    %561 = vst [vmem:[#allocation2 + $0x7] sm:$0x1] %v545
    // Predicated region
    $region30: #{cifar10_cnn_head.1} parent=1 // pred_check
      _
    $region31: #{cifar10_cnn_head.1} parent=1 // pred_check_branch
      %563 = sbr.rel (0) target = $region33
    $region32: #{cifar10_cnn_head.1} parent=1 // pred_region
      // Predicated region
      $region34: #{cifar10_cnn_head.1} parent=32 // pred_check
        _
      $region35: #{cifar10_cnn_head.1} parent=32 // pred_check_branch
        %565 = sbr.rel (0) target = $region37
      $region36: #{cifar10_cnn_head.1} parent=32 // pred_region
        // Predicated region
        $region38: #{cifar10_cnn_head.1} parent=36 // pred_check
          _
        $region39: #{cifar10_cnn_head.1} parent=36 // pred_check_branch
          %567 = sbr.rel target = $region41
        $region40: #{cifar10_cnn_head.1} parent=36 // pred_region
          // Predicated region
          $region53: #{cifar10_cnn_head.1} parent=40 // pred_check
            _
          $region54: #{cifar10_cnn_head.1} parent=40 // pred_check_branch
            %583 = sbr.rel (0) target = $region56
          $region55: #{cifar10_cnn_head.1} parent=40 // pred_region
            %s585 = ssub.s32 2, 1
            loop: start=0, step=1, limit=1
            $region57: #{cifar10_cnn_head.1} parent=55 // loop_pre_header
              _
            $region58: #{cifar10_cnn_head.1} parent=55 // loop_header
              %s587 = sphi 0, %s591
              %p588 = scmp.ge.s32.totalorder %s587, 1
              %s592 = sphi [#allocation2], [#allocation2]
              %s593 = sphi %s7, %s7
            $region59: #{cifar10_cnn_head.1} parent=55 // loop_header_branch
              %590 = sbr.rel (%p588) target = $region63
            $region60: #{cifar10_cnn_head.1} parent=55 // loop_body
              %v594 = vld [vmem:[%s592] sm:%s585]
              %595 = vst [vmem:[%s593] sm:%s585] %v594
            $region61: #{cifar10_cnn_head.1} parent=55 // loop_footer
              %s591 = sadd.s32 1, %s587
            $region62: #{cifar10_cnn_head.1} parent=55 // loop_footer_branch
              %586 = sbr.rel target = $region58
            $region63: #{cifar10_cnn_head.1} parent=55 // loop_exit
              _
          $region56: #{cifar10_cnn_head.1} parent=40 // pred_fallthru
            _
        $region41: #{cifar10_cnn_head.1} parent=36 // pred_fallthru
          _
        // Predicated region
        $region42: #{cifar10_cnn_head.1} parent=36 // pred_check
          _
        $region43: #{cifar10_cnn_head.1} parent=36 // pred_check_branch
          %569 = sbr.rel (0) target = $region45
        $region44: #{cifar10_cnn_head.1} parent=36 // pred_region
          %s571 = ssub.s32 2, 1
          loop: start=0, step=1, limit=1
          $region46: #{cifar10_cnn_head.1} parent=44 // loop_pre_header
            _
          $region47: #{cifar10_cnn_head.1} parent=44 // loop_header
            %s573 = sphi 0, %s577
            %p574 = scmp.ge.s32.totalorder %s573, 1
            %s578 = sphi [#allocation2], [#allocation2]
            %s579 = sphi %s7, %s7
          $region48: #{cifar10_cnn_head.1} parent=44 // loop_header_branch
            %576 = sbr.rel (%p574) target = $region52
          $region49: #{cifar10_cnn_head.1} parent=44 // loop_body
            %v580 = vld [vmem:[%s578] sm:%s571]
            %581 = vst [vmem:[%s579] sm:%s571] %v580
          $region50: #{cifar10_cnn_head.1} parent=44 // loop_footer
            %s577 = sadd.s32 1, %s573
          $region51: #{cifar10_cnn_head.1} parent=44 // loop_footer_branch
            %572 = sbr.rel target = $region47
          $region52: #{cifar10_cnn_head.1} parent=44 // loop_exit
            _
        $region45: #{cifar10_cnn_head.1} parent=36 // pred_fallthru
          _
      $region37: #{cifar10_cnn_head.1} parent=32 // pred_fallthru
        _
      %596 = vnop
    $region33: #{cifar10_cnn_head.1} parent=1 // pred_fallthru
      _
    // Predicated region
    $region64: #{cifar10_cnn_head.1} parent=1 // pred_check
      _
    $region65: #{cifar10_cnn_head.1} parent=1 // pred_check_branch
      %598 = sbr.rel (0) target = $region67
    $region66: #{cifar10_cnn_head.1} parent=1 // pred_region
      _
    $region67: #{cifar10_cnn_head.1} parent=1 // pred_fallthru
      _

</llo_original>
